<compile_context>
chip_gen: v7x
topology: tpu7x:2x2x1
jax: 0.10.0
libtpu: 0.0.40
codegen_flags: <defaults>
</compile_context>

<pallas_src>
import functools

import jax
import jax.numpy as jnp
from jax.experimental import pallas as pl
from jax.experimental.pallas import tpu as pltpu


# ---------------------------------------------------------------------------
# Kernel body
# ---------------------------------------------------------------------------
def rope_mul_kernel(x_ref, tab_ref, o_ref):
    # Batch-folded path: x_ref/o_ref are (B, bt, C), tab_ref is (bt, C) and
    # broadcasts over the leading batch dim.  Gridded-batch path: all are (bt, C).
    o_ref[...] = (x_ref[...].astype(jnp.float32) * tab_ref[...]).astype(o_ref.dtype)


# ---------------------------------------------------------------------------
# Folded (cos + sign*sin) table, cached per (T, D, base) -- built once, f32.
# ---------------------------------------------------------------------------
@functools.lru_cache(maxsize=32)
def _rope_table(T: int, D: int, base: int) -> jax.Array:
    d2 = D // 2
    theta = 1.0 / (jnp.float32(base) ** jnp.arange(0, d2, dtype=jnp.float32))
    seq = jnp.arange(0, T, dtype=jnp.float32)
    angle = seq[:, None] * theta[None, :]                   # [T, d2]
    angle = jnp.concatenate([angle, angle], axis=1)         # [T, D]
    sign = jnp.concatenate([jnp.ones((d2,), jnp.float32),
                            -jnp.ones((d2,), jnp.float32)])
    return jnp.cos(angle) + sign[None, :] * jnp.sin(angle)  # f32 [T, D]


# ---------------------------------------------------------------------------
# Generation-aware VMEM budget & tile sizing
# ---------------------------------------------------------------------------
def _vmem_budget_bytes() -> int:
    try:
        cap = int(pltpu.get_tpu_info().vmem_capacity_bytes)
        if cap <= 0:
            raise ValueError
    except Exception:
        cap = 64 * 1024 * 1024  # conservative (v7x-sized) fallback
    # ~56 MiB on v7x (64 MiB physical), ~112 MiB on v5e/v6e (128 MiB physical).
    return (cap * 7) // 8


def _choose_block_rows(rows: int, cols: int, itemsize: int,
                       b_eff: int, budget: int) -> int:
    # Sublane quantum per dtype: 8 rows (f32), 16 (bf16), 32 (int8/fp8).
    quantum = max(8, 32 // max(1, itemsize))
    # Double-buffered bytes per block-row: x + out in x.dtype, table in f32.
    per_row = 2 * (2 * b_eff * cols * itemsize + cols * 4)
    max_rows = budget // per_row
    # Cap any single stream block at ~16 MiB (diminishing returns beyond that).
    max_rows = min(max_rows, (16 * 1024 * 1024) // max(1, b_eff * cols * itemsize))
    if max_rows >= rows:
        block = rows
    else:
        block = max(quantum, (max_rows // quantum) * quantum)
    # Prefer >= 2 row blocks on big inputs so v7x's 2 TensorCores both get work.
    if block == rows and b_eff * rows * cols * itemsize > (4 << 20):
        half = -(-rows // 2)                      # ceil(rows / 2)
        half = -(-half // quantum) * quantum      # round up to quantum
        if quantum <= half < rows:
            block = half
    return block


# ---------------------------------------------------------------------------
# Public wrapper
# ---------------------------------------------------------------------------
def rotary_embeddings(x: jax.Array, *, base: int = 10000,
                      table: jax.Array | None = None,
                      block_rows: int | None = None) -> jax.Array:
    """x: [batch, context, embed_dim] -> [batch, context, embed_dim]."""
    B, T, D = x.shape
    if table is None:
        table = _rope_table(T, D, int(base))
    table = table.astype(jnp.float32)

    # Lane-density: present a 128-wide last dim when D itself isn't a multiple
    # of 128 (pure layout plumbing -- the op is elementwise and the table is
    # reshaped identically).
    if D % 128 != 0 and (T * D) % 128 == 0:
        rows, cols = (T * D) // 128, 128
    else:
        rows, cols = T, D
    x2 = x.reshape(B, rows, cols)
    tab2 = table.reshape(rows, cols)

    itemsize = jnp.dtype(x.dtype).itemsize
    budget = _vmem_budget_bytes()

    fold_batch = B <= 4
    b_eff = B if fold_batch else 1
    if block_rows is None:
        block_rows = _choose_block_rows(rows, cols, itemsize, b_eff, budget)
    block_rows = min(block_rows, rows)
    num_r = pl.cdiv(rows, block_rows)  # partial last block handled by Pallas

    if fold_batch:
        grid = (num_r,)
        in_specs = [
            pl.BlockSpec((B, block_rows, cols), lambda r: (0, r, 0)),
            pl.BlockSpec((block_rows, cols), lambda r: (r, 0)),
        ]
        out_specs = pl.BlockSpec((B, block_rows, cols), lambda r: (0, r, 0))
        dims = ("parallel",)
    else:
        # Batch innermost so the table block is reused (not re-DMA'd) across B.
        grid = (num_r, B)
        in_specs = [
            pl.BlockSpec((pl.Squeezed(), block_rows, cols), lambda r, b: (b, r, 0)),
            pl.BlockSpec((block_rows, cols), lambda r, b: (r, 0)),
        ]
        out_specs = pl.BlockSpec((pl.Squeezed(), block_rows, cols),
                                 lambda r, b: (b, r, 0))
        dims = ("parallel", "parallel")

    out = pl.pallas_call(
        rope_mul_kernel,
        out_shape=jax.ShapeDtypeStruct((B, rows, cols), x.dtype),
        grid=grid,
        in_specs=in_specs,
        out_specs=out_specs,
        compiler_params=pltpu.CompilerParams(
            dimension_semantics=dims,
            vmem_limit_bytes=int(budget),
        ),
    )(x2, tab2)
    return out.reshape(B, T, D)


# ---------------------------------------------------------------------------
# Pure-JAX reference mirroring the PyTorch forward
# ---------------------------------------------------------------------------
def rotary_embeddings_ref(x: jnp.ndarray, *, base: int = 10000) -> jnp.ndarray:
    B, T, D = x.shape
    d2 = D // 2
    theta = 1.0 / (jnp.float32(base) ** jnp.arange(0, d2, dtype=jnp.float32))
    seq = jnp.arange(0, T, dtype=jnp.float32)
    idx_theta = jnp.einsum("i,j->ij", seq, theta)
    idx_theta = jnp.concatenate([idx_theta, idx_theta], axis=1)  # [T, D]
    cos = jnp.cos(idx_theta)[None, :, :]
    sin = jnp.sin(idx_theta)[None, :, :]
    neg_half = jnp.concatenate([x[:, :, :d2], -x[:, :, d2:]], axis=-1)
    return (x.astype(jnp.float32) * cos + neg_half.astype(jnp.float32) * sin
            ).astype(x.dtype)


if __name__ == "__main__":
    key = jax.random.PRNGKey(0)

    # Test 1: small shape implied by the module: [batch, context, embed_dim].
    x1 = jax.random.normal(key, (2, 8, 8), dtype=jnp.float32)
    out1 = jax.block_until_ready(rotary_embeddings(x1, base=10000))
    ref1 = rotary_embeddings_ref(x1, base=10000)
    assert out1.shape == (2, 8, 8)
    assert jnp.allclose(out1, ref1, atol=1e-5, rtol=1e-5), "mismatch (test 1)"

    # Test 2: lane-dense reshape path (D=64 -> cols=128), batch-folded,
    # multiple grid steps along the row axis.
    x2 = jax.random.normal(jax.random.PRNGKey(1), (2, 32, 64), dtype=jnp.float32)
    out2 = jax.block_until_ready(rotary_embeddings(x2, base=10000, block_rows=8))
    ref2 = rotary_embeddings_ref(x2, base=10000)
    assert jnp.allclose(out2, ref2, atol=1e-5, rtol=1e-5), "mismatch (test 2)"

    # Test 3: larger batch (B > 4) -> gridded-batch path with squeezed batch dim.
    x3 = jax.random.normal(jax.random.PRNGKey(2), (6, 32, 128), dtype=jnp.float32)
    out3 = jax.block_until_ready(rotary_embeddings(x3, base=10000, block_rows=8))
    ref3 = rotary_embeddings_ref(x3, base=10000)
    assert jnp.allclose(out3, ref3, atol=1e-5, rtol=1e-5), "mismatch (test 3)"

    print("KERNEL_OK")
</pallas_src>

<mosaic_0001>
module attributes {stable_mosaic.version = 11 : i64} {
  func.func @rope_mul_kernel(%arg0: i32, %arg1: memref<2x8x8xf32, #tpu.memory_space<vmem>>, %arg2: memref<8x8xf32, #tpu.memory_space<vmem>>, %arg3: memref<2x8x8xf32, #tpu.memory_space<vmem>>) attributes {dimension_semantics = [#tpu.dimension_semantics<parallel>], iteration_bounds = array<i64: 1>, scalar_prefetch = 0 : i64, scratch_operands = 0 : i64, tpu.core_type = #tpu.core_type<tc>, window_params = [{transform_indices = @transform_0, window_bounds = array<i64: 2, 8, 8>}, {transform_indices = @transform_1, window_bounds = array<i64: 8, 8>}, {transform_indices = @transform_2, window_bounds = array<i64: 2, 8, 8>}]} {
    %c0 = arith.constant 0 : index
    %c0_0 = arith.constant 0 : index
    %c0_1 = arith.constant 0 : index
    %0 = vector.load %arg1[%c0, %c0_0, %c0_1] : memref<2x8x8xf32, #tpu.memory_space<vmem>>, vector<2x8x8xf32>
    %c0_2 = arith.constant 0 : index
    %c0_3 = arith.constant 0 : index
    %1 = vector.load %arg2[%c0_2, %c0_3] : memref<8x8xf32, #tpu.memory_space<vmem>>, vector<8x8xf32>
    %2 = vector.shape_cast %1 : vector<8x8xf32> to vector<1x8x8xf32>
    %3 = vector.broadcast %2 : vector<1x8x8xf32> to vector<2x8x8xf32>
    %4 = arith.mulf %0, %3 : vector<2x8x8xf32>
    %c0_4 = arith.constant 0 : index
    %c0_5 = arith.constant 0 : index
    %c0_6 = arith.constant 0 : index
    %5 = vector.load %arg3[%c0_4, %c0_5, %c0_6] : memref<2x8x8xf32, #tpu.memory_space<vmem>>, vector<2x8x8xf32>
    tpu.vector_store %arg3[%c0_4, %c0_5, %c0_6], %4 {strides = array<i32>} : memref<2x8x8xf32, #tpu.memory_space<vmem>>, vector<2x8x8xf32>,
    return
  }
  func.func @transform_0(%arg0: i32) -> (i32, i32, i32) {
    %c0_i32 = arith.constant 0 : i32
    %c0_i32_0 = arith.constant 0 : i32
    %c0_i32_1 = arith.constant 0 : i32
    return %c0_i32, %arg0, %c0_i32_0 : i32, i32, i32
  }
  func.func @transform_1(%arg0: i32) -> (i32, i32) {
    %c0_i32 = arith.constant 0 : i32
    %c0_i32_0 = arith.constant 0 : i32
    return %arg0, %c0_i32 : i32, i32
  }
  func.func @transform_2(%arg0: i32) -> (i32, i32, i32) {
    %c0_i32 = arith.constant 0 : i32
    %c0_i32_0 = arith.constant 0 : i32
    %c0_i32_1 = arith.constant 0 : i32
    return %c0_i32, %arg0, %c0_i32_0 : i32, i32, i32
  }
}

</mosaic_0001>

<llo_original>
// kernel: tpu_custom_call.1
$region0: #{tpu_custom_call.1}
  #allocation0 [shape = 'u32[]', space=smem, size = 0x4, offset = 0x4, fixed_abs, tag = 'smem constant byte address 0x4 - core index']
  #allocation1 [shape = 'u32[144,128]{1,0:T(1,128)}', space=vmem, size = 0x12000, scoped, tag = 'internal scratch']
  %s0 = inlined_call_operand.hbm [shape: f32[2,8,8], index: 0, kind: input, shape index: {}]
  %s1 = inlined_call_operand.hbm [shape: f32[8,8], index: 1, kind: input, shape index: {}]
  %s2 = inlined_call_operand.hbm [shape: f32[2,8,8], index: 2, kind: output, shape index: {}]
  %s3 = sld [smem:[#allocation0]]
  $region26: #{tpu_custom_call.1} parent=0
    _
  %s5 = ssub.s32 1, %s3
  %s6 = scalar_select 0, %s5, %s3
  $region1: #{tpu_custom_call.1} parent=0
    #allocation2 [shape = 'u8[8192]{0}', space=vmem, size = 0x2000, scoped, tag = 'input window, operand 0, single buffered']
    #allocation3 [shape = 's32[1]{0}', space=sflag, size = 0x4, scoped, tag = 'scoped memory for tpu_custom_call.1']
    #allocation4 [shape = 's32[1]{0}', space=sflag, size = 0x4, scoped, tag = 'scoped memory for tpu_custom_call.1']
    #allocation5 [shape = 'u8[4096]{0}', space=vmem, size = 0x1000, scoped, tag = 'input window, operand 1, single buffered']
    #allocation6 [shape = 's32[1]{0}', space=sflag, size = 0x4, scoped, tag = 'scoped memory for tpu_custom_call.1']
    #allocation7 [shape = 'u8[8192]{0}', space=vmem, size = 0x2000, scoped, tag = 'output window, operand 0, single buffered']
    %7 = vsyncpa [#allocation3], 0
    %8 = vsyncpa [#allocation6], 0
    %9 = vsyncpa [#allocation4], 0
    // Predicated region
    $region2: #{tpu_custom_call.1} parent=1 // pred_check
      _
    $region3: #{tpu_custom_call.1} parent=1 // pred_check_branch
      %11 = sbr.rel (0) target = $region5
    $region4: #{tpu_custom_call.1} parent=1 // pred_region
      %s13 = ssub.s32 256, 256
      %14 = vsyncadd [#allocation3], %s13
      %s15 = sshll.u32 [#allocation2], 4
      %s16 = int_to_ptr.vmem [resolvable:$true] %s15
      %21 = dma.hbm_to_vmem [thread:$0]  %s0, 256, %s16, [#allocation3], 128, 128, 8
    $region5: #{tpu_custom_call.1} parent=1 // pred_fallthru
      _
    // Predicated region
    $region6: #{tpu_custom_call.1} parent=1 // pred_check
      _
    $region7: #{tpu_custom_call.1} parent=1 // pred_check_branch
      %23 = sbr.rel (0) target = $region9
    $region8: #{tpu_custom_call.1} parent=1 // pred_region
      %s25 = ssub.s32 128, 128
      %26 = vsyncadd [#allocation6], %s25
      %s28 = sshll.u32 [#allocation5], 4
      %s29 = int_to_ptr.vmem [resolvable:$true] %s28
      %31 = dma.hbm_to_vmem [thread:$0]  %s1, 128, %s29, [#allocation6]
    $region9: #{tpu_custom_call.1} parent=1 // pred_fallthru
      _
    // Predicated region
    $region10: #{tpu_custom_call.1} parent=1 // pred_check
      _
    $region11: #{tpu_custom_call.1} parent=1 // pred_check_branch
      %33 = sbr.rel (0) target = $region13
    $region12: #{tpu_custom_call.1} parent=1 // pred_region
      %34 = dma.done [#allocation3], 256
    $region13: #{tpu_custom_call.1} parent=1 // pred_fallthru
      _
    // Predicated region
    $region14: #{tpu_custom_call.1} parent=1 // pred_check
      _
    $region15: #{tpu_custom_call.1} parent=1 // pred_check_branch
      %36 = sbr.rel (0) target = $region17
    $region16: #{tpu_custom_call.1} parent=1 // pred_region
      %37 = dma.done [#allocation6], 128
    $region17: #{tpu_custom_call.1} parent=1 // pred_fallthru
      _
    %v38 = vld [vmem:[#allocation2] sm:$0xff]
    %v39 = vld [vmem:[#allocation2 + $0x8] sm:$0xff]
    %v40 = vld [vmem:[#allocation5] sm:$0xff]
    %v41 = vmul.f32 %v38, %v40
    %v42 = vmul.f32 %v39, %v40
    %vm43 = vcmask 64512
    %44 = vst.msk [vmem:[#allocation7] sm:$0xff] %vm43, %v41
    %45 = vst.msk [vmem:[#allocation7 + $0x8] sm:$0xff] %vm43, %v42
    // Predicated region
    $region18: #{tpu_custom_call.1} parent=1 // pred_check
      _
    $region19: #{tpu_custom_call.1} parent=1 // pred_check_branch
      %47 = sbr.rel (0) target = $region21
    $region20: #{tpu_custom_call.1} parent=1 // pred_region
      %s49 = ssub.s32 256, 256
      %50 = vsyncadd [#allocation4], %s49
      %s51 = sshll.u32 [#allocation7], 4
      %s52 = int_to_ptr.vmem [resolvable:$true] %s51
      %57 = dma.vmem_to_hbm [thread:$0]  %s52, 256, %s2, [#allocation4], 128, 128, 8
    $region21: #{tpu_custom_call.1} parent=1 // pred_fallthru
      _
    // Predicated region
    $region22: #{tpu_custom_call.1} parent=1 // pred_check
      _
    $region23: #{tpu_custom_call.1} parent=1 // pred_check_branch
      %59 = sbr.rel (0) target = $region25
    $region24: #{tpu_custom_call.1} parent=1 // pred_region
      %60 = dma.done [#allocation4], 256
    $region25: #{tpu_custom_call.1} parent=1 // pred_fallthru
      _
    %61 = vsyncpa [#allocation3], 1
    %62 = vsyncpa [#allocation6], 1
    %63 = vsyncpa [#allocation4], 1

</llo_original>
